<compile_context>
chip_gen: v7x
topology: tpu7x:2x2x1
jax: 0.10.0
libtpu: 0.0.40
codegen_flags: <defaults>
</compile_context>

<pallas_src>
import functools

import jax
import jax.numpy as jnp
from jax.experimental import pallas as pl
from jax.experimental.pallas import tpu as pltpu


# --------------------------- hardware-aware budgets ---------------------------
def _round_up(n, m):
    return ((n + m - 1) // m) * m


def _tpu_vmem_bytes():
    """Physical per-core VMEM; conservative fallback when not on a TPU."""
    try:
        return int(pltpu.get_tpu_info().vmem_capacity_bytes)
    except Exception:
        return 64 * 1024 * 1024  # v7x per-TensorCore VMEM (smallest of the gens)


def _vmem_limit_bytes(vmem_cap):
    # ~75% of physical VMEM: ~96 MiB on v5e/v6e (128 MiB), ~48 MiB on v7x (64 MiB).
    return int(min(max(32 * 1024 * 1024, int(vmem_cap * 0.75)), 96 * 1024 * 1024))


def _choose_tile_rows(rows, d, itemsize, avail_bytes, max_tile=512):
    """Largest row tile (multiple of 32, <=512) whose working set fits.

    Budget counts the double-buffered x/out tiles plus ~4 full-tile f32
    temporaries that live inside the kernel (x cast, normed, y, dropout mask)
    and the bf16 normed scratch used by the N-tiled path."""
    avail = max(int(avail_bytes), 4 << 20)
    per_row = 4 * d * itemsize + 4 * d * 4 + 2 * d
    cap = max(32, (avail // max(per_row, 1)) // 32 * 32)
    return int(max(32, min(max_tile, cap, _round_up(rows, 32))))


def _const_spec(shape, index_map):
    """BlockSpec for grid-invariant operands: request a single pipeline buffer
    so e.g. W does not reserve 2x its bytes in VMEM.  Falls back to a plain
    (double-buffered) BlockSpec if this jax version lacks pipeline_mode."""
    try:
        return pl.BlockSpec(shape, index_map, pipeline_mode=pl.Buffered(1))
    except Exception:
        return pl.BlockSpec(shape, index_map)


# ----------------------------- dropout (hash PRNG) ----------------------------
# TODO(synk): mask cannot bit-match torch's RNG stream; it is a counter-based
# hash of (seed, global element index), statistically equivalent and
# reproducible regardless of the tiling chosen.
def _dropout(y, seed, row_base, col_base, total_cols, *, p):
    if p <= 0.0:
        return y
    if p >= 1.0:
        return jnp.zeros_like(y)
    shape = y.shape
    row_base = jnp.asarray(row_base).astype(jnp.uint32)
    col_base = jnp.asarray(col_base).astype(jnp.uint32)
    r = jax.lax.broadcasted_iota(jnp.int32, shape, 0).astype(jnp.uint32) + row_base
    c = jax.lax.broadcasted_iota(jnp.int32, shape, 1).astype(jnp.uint32) + col_base
    h = (r * jnp.uint32(total_cols) + c) ^ seed.astype(jnp.uint32)
    # lowbias32-style avalanche hash (uint32 arithmetic wraps mod 2^32).
    h = (h ^ (h >> jnp.uint32(16))) * jnp.uint32(0x7FEB352D)
    h = (h ^ (h >> jnp.uint32(15))) * jnp.uint32(0x846CA68B)
    h = h ^ (h >> jnp.uint32(16))
    # keep-probability is 1-p up to 2^-32 quantization (negligible).
    thr = jnp.uint32(min(int(p * 4294967296.0), 4294967295))
    return jnp.where(h >= thr, y * (1.0 / (1.0 - p)), 0.0)


def _layernorm_rows(x_f32, g, b, eps):
    mean = jnp.mean(x_f32, axis=-1, keepdims=True)
    ex2 = jnp.mean(x_f32 * x_f32, axis=-1, keepdims=True)
    var = jnp.maximum(ex2 - mean * mean, 0.0)  # two independent lane reductions
    return (x_f32 - mean) * jax.lax.rsqrt(var + eps) * g + b


# ---------------------- fused kernels (known Linear sublayer) -----------------
def _fused_kernel_resident(seed_ref, x_ref, g_ref, b_ref, w_ref, wb_ref, o_ref,
                           *, eps, p, training, tile_rows, d_model):
    x = x_ref[...].astype(jnp.float32)
    normed = _layernorm_rows(x, g_ref[...], b_ref[...], eps)
    y = jnp.dot(normed.astype(jnp.bfloat16), w_ref[...],
                preferred_element_type=jnp.float32) + wb_ref[...]
    if training and p > 0.0:
        row_base = pl.program_id(0) * tile_rows
        y = _dropout(y, seed_ref[0], row_base, 0, d_model, p=p)
    o_ref[...] = (x + y).astype(o_ref.dtype)


def _fused_kernel_ntiled(seed_ref, x_ref, xs_ref, g_ref, b_ref, w_ref, wb_ref,
                         o_ref, normed_ref, *, eps, p, training,
                         tile_rows, tile_n, d_model):
    n = pl.program_id(1)

    @pl.when(n == 0)  # LayerNorm once per row tile, reused across column tiles
    def _():
        x = x_ref[...].astype(jnp.float32)
        normed_ref[...] = _layernorm_rows(x, g_ref[...], b_ref[...],
                                          eps).astype(jnp.bfloat16)

    y = jnp.dot(normed_ref[...], w_ref[...],
                preferred_element_type=jnp.float32) + wb_ref[...]
    if training and p > 0.0:
        row_base = pl.program_id(0) * tile_rows
        col_base = n * tile_n
        y = _dropout(y, seed_ref[0], row_base, col_base, d_model, p=p)
    o_ref[...] = (xs_ref[...].astype(jnp.float32) + y).astype(o_ref.dtype)


def sublayer_connection_fused_linear(x, gamma, beta, W, bsub, *,
                                     dropout_p=0.1, training=False, seed=0,
                                     eps=1e-5, max_w_cols=None):
    """x + dropout(LayerNorm(x) @ W + bsub), fused in one pallas_call."""
    orig_shape = x.shape
    D = x.shape[-1]
    x2 = x.reshape(-1, D)
    R = x2.shape[0]

    vmem_limit = _vmem_limit_bytes(_tpu_vmem_bytes())
    budget = int(vmem_limit * 0.75)  # headroom for Mosaic internal scratch

    w_bf = W.astype(jnp.bfloat16)                     # bf16 weight: native MXU rate
    g2 = gamma.reshape(1, D).astype(jnp.float32)
    b2 = beta.reshape(1, D).astype(jnp.float32)
    wb2 = bsub.reshape(1, D).astype(jnp.float32)
    seed_arr = jnp.array([seed], dtype=jnp.int32)

    # Column tile for W: full D if it comfortably fits VMEM, else stream slabs.
    if max_w_cols is not None:
        tile_n = min(D, max(128, (int(max_w_cols) // 128) * 128))
    elif 2 * D * D * 2 <= budget // 2:                # assume double-buffered worst case
        tile_n = D
    else:
        cols = (budget // 2) // (2 * D * 2)
        tile_n = max(128, min(D, (cols // 128) * 128))
    if tile_n >= D:
        tile_n = D

    w_vmem = 2 * D * tile_n * 2                       # conservative (2 buffers, bf16)
    tile_rows = _choose_tile_rows(R, D, x2.dtype.itemsize, budget - w_vmem)
    grid_rows = pl.cdiv(R, tile_rows)                 # partial edge block is masked

    if tile_n == D:
        grid_spec = pltpu.PrefetchScalarGridSpec(
            num_scalar_prefetch=1,
            grid=(grid_rows,),
            in_specs=[
                pl.BlockSpec((tile_rows, D), lambda i, s: (i, 0)),   # x rows
                _const_spec((1, D), lambda i, s: (0, 0)),            # gamma
                _const_spec((1, D), lambda i, s: (0, 0)),            # beta
                _const_spec((D, D), lambda i, s: (0, 0)),            # W (resident)
                _const_spec((1, D), lambda i, s: (0, 0)),            # linear bias
            ],
            out_specs=pl.BlockSpec((tile_rows, D), lambda i, s: (i, 0)),
        )
        kernel = functools.partial(_fused_kernel_resident, eps=eps, p=dropout_p,
                                   training=training, tile_rows=tile_rows,
                                   d_model=D)
        out = pl.pallas_call(
            kernel,
            out_shape=jax.ShapeDtypeStruct((R, D), x.dtype),
            grid_spec=grid_spec,
            compiler_params=pltpu.CompilerParams(
                dimension_semantics=("parallel",),
                vmem_limit_bytes=vmem_limit),
        )(seed_arr, x2, g2, b2, w_bf, wb2)
    else:
        grid_spec = pltpu.PrefetchScalarGridSpec(
            num_scalar_prefetch=1,
            grid=(grid_rows, pl.cdiv(D, tile_n)),
            in_specs=[
                pl.BlockSpec((tile_rows, D), lambda i, n, s: (i, 0)),       # x rows (LN)
                pl.BlockSpec((tile_rows, tile_n), lambda i, n, s: (i, n)),  # x slab (residual)
                _const_spec((1, D), lambda i, n, s: (0, 0)),                # gamma
                _const_spec((1, D), lambda i, n, s: (0, 0)),                # beta
                pl.BlockSpec((D, tile_n), lambda i, n, s: (0, n)),          # W column slab
                pl.BlockSpec((1, tile_n), lambda i, n, s: (0, n)),          # bias slab
            ],
            out_specs=pl.BlockSpec((tile_rows, tile_n), lambda i, n, s: (i, n)),
            scratch_shapes=[pltpu.VMEM((tile_rows, D), jnp.bfloat16)],      # cached LN
        )
        kernel = functools.partial(_fused_kernel_ntiled, eps=eps, p=dropout_p,
                                   training=training, tile_rows=tile_rows,
                                   tile_n=tile_n, d_model=D)
        out = pl.pallas_call(
            kernel,
            out_shape=jax.ShapeDtypeStruct((R, D), x.dtype),
            grid_spec=grid_spec,
            compiler_params=pltpu.CompilerParams(
                dimension_semantics=("parallel", "arbitrary"),
                vmem_limit_bytes=vmem_limit),
        )(seed_arr, x2, x2, g2, b2, w_bf, wb2)
    return out.reshape(orig_shape)


# ------------------------- general path: LayerNorm ----------------------------
def _layernorm_kernel(x_ref, g_ref, b_ref, o_ref, *, eps):
    x = x_ref[...].astype(jnp.float32)
    o_ref[...] = _layernorm_rows(x, g_ref[...], b_ref[...], eps).astype(o_ref.dtype)


def layernorm_pallas(x2d, gamma, beta, *, eps=1e-5, out_dtype=None):
    R, D = x2d.shape
    out_dtype = x2d.dtype if out_dtype is None else out_dtype
    vmem_limit = _vmem_limit_bytes(_tpu_vmem_bytes())
    tile = _choose_tile_rows(R, D, x2d.dtype.itemsize, int(vmem_limit * 0.75))
    g2 = gamma.reshape(1, D).astype(jnp.float32)
    b2 = beta.reshape(1, D).astype(jnp.float32)
    return pl.pallas_call(
        functools.partial(_layernorm_kernel, eps=eps),
        out_shape=jax.ShapeDtypeStruct((R, D), out_dtype),
        grid=(pl.cdiv(R, tile),),
        in_specs=[pl.BlockSpec((tile, D), lambda i: (i, 0)),
                  _const_spec((1, D), lambda i: (0, 0)),
                  _const_spec((1, D), lambda i: (0, 0))],
        out_specs=pl.BlockSpec((tile, D), lambda i: (i, 0)),
        compiler_params=pltpu.CompilerParams(
            dimension_semantics=("parallel",),
            vmem_limit_bytes=vmem_limit),
    )(x2d, g2, b2)


# -------------- general path: residual add + (optional) dropout --------------
def _residual_dropout_kernel(seed_ref, x_ref, y_ref, o_ref, *, p, training,
                             tile_rows, d_model):
    y = y_ref[...].astype(jnp.float32)
    if training and p > 0.0:
        row_base = pl.program_id(0) * tile_rows
        y = _dropout(y, seed_ref[0], row_base, 0, d_model, p=p)
    o_ref[...] = (x_ref[...].astype(jnp.float32) + y).astype(o_ref.dtype)


def residual_dropout_pallas(x2d, y2d, *, p, training, seed):
    R, D = x2d.shape
    vmem_limit = _vmem_limit_bytes(_tpu_vmem_bytes())
    tile = _choose_tile_rows(R, D, x2d.dtype.itemsize, int(vmem_limit * 0.75))
    seed_arr = jnp.array([seed], dtype=jnp.int32)
    # TODO(synk): could pass input_output_aliases to reuse y's HBM buffer for the
    # output when the caller donates it; left out to keep semantics side-effect free.
    grid_spec = pltpu.PrefetchScalarGridSpec(
        num_scalar_prefetch=1,
        grid=(pl.cdiv(R, tile),),
        in_specs=[pl.BlockSpec((tile, D), lambda i, s: (i, 0)),
                  pl.BlockSpec((tile, D), lambda i, s: (i, 0))],
        out_specs=pl.BlockSpec((tile, D), lambda i, s: (i, 0)),
    )
    return pl.pallas_call(
        functools.partial(_residual_dropout_kernel, p=p, training=training,
                          tile_rows=tile, d_model=D),
        out_shape=jax.ShapeDtypeStruct((R, D), x2d.dtype),
        grid_spec=grid_spec,
        compiler_params=pltpu.CompilerParams(
            dimension_semantics=("parallel",),
            vmem_limit_bytes=vmem_limit),
    )(seed_arr, x2d, y2d)


# --------------------------- module-level wrapper -----------------------------
def sublayer_connection(x, sublayer, gamma, beta, *,
                        dropout_p=0.1, training=False, seed=0, eps=1e-5,
                        ln_dtype=None):
    """General path for an opaque `sublayer` callable (stays in plain JAX)."""
    orig_shape = x.shape
    D = x.shape[-1]
    x2 = x.reshape(-1, D)
    normed = layernorm_pallas(x2, gamma, beta, eps=eps, out_dtype=ln_dtype)
    y = sublayer(normed.reshape(orig_shape)).reshape(-1, D)
    out = residual_dropout_pallas(x2, y, p=dropout_p, training=training, seed=seed)
    return out.reshape(orig_shape)


# --------------------------------- demo --------------------------------------
def _reference(x, gamma, beta, W, bsub, eps=1e-5):
    mean = jnp.mean(x, axis=-1, keepdims=True)
    var = jnp.mean((x - mean) ** 2, axis=-1, keepdims=True)
    normed = (x - mean) * jax.lax.rsqrt(var + eps) * gamma + beta
    return x + (jnp.einsum("bsd,de->bse", normed, W) + bsub)


if __name__ == "__main__":
    key = jax.random.PRNGKey(0)
    kx, kg, kb, kw, kwb, kx2, kw2, kwb2, kg2, kb2 = jax.random.split(key, 10)

    # --- main config: B=2, S=8, D=128 -------------------------------------
    B, S, D = 2, 8, 128
    x = jax.random.normal(kx, (B, S, D), dtype=jnp.float32)
    gamma = 1.0 + 0.1 * jax.random.normal(kg, (D,), dtype=jnp.float32)
    beta = 0.1 * jax.random.normal(kb, (D,), dtype=jnp.float32)
    W = 0.05 * jax.random.normal(kw, (D, D), dtype=jnp.float32)
    bsub = 0.05 * jax.random.normal(kwb, (D,), dtype=jnp.float32)
    sublayer = lambda h: jnp.einsum("bsd,de->bse", h, W) + bsub
    ref = _reference(x, gamma, beta, W, bsub)

    # 1) Fused path (LN + bf16 Linear + dropout + residual in ONE pallas_call).
    out_fused = jax.block_until_ready(sublayer_connection_fused_linear(
        x, gamma, beta, W, bsub, dropout_p=0.1, training=False, seed=0))
    assert jnp.allclose(out_fused, ref, atol=5e-2, rtol=1e-2), \
        f"fused max err {jnp.max(jnp.abs(out_fused - ref))}"

    # 2) General path (opaque sublayer callable, f32 end-to-end).
    out_general = jax.block_until_ready(sublayer_connection(
        x, sublayer, gamma, beta, dropout_p=0.1, training=False, seed=0))
    assert jnp.allclose(out_general, ref, atol=1e-4, rtol=1e-4), \
        f"general max err {jnp.max(jnp.abs(out_general - ref))}"

    # 3) Training mode: hash-PRNG dropout (p=0.5) — check drop fraction & finiteness.
    out_train = jax.block_until_ready(sublayer_connection_fused_linear(
        x, gamma, beta, W, bsub, dropout_p=0.5, training=True, seed=123))
    assert bool(jnp.all(jnp.isfinite(out_train)))
    dropped = float(jnp.mean((out_train == x).astype(jnp.float32)))
    assert 0.35 < dropped < 0.65, f"unexpected dropout fraction {dropped}"

    # 4) N-tiled weight path + partial (non-multiple-of-tile) row block:
    #    B=2, S=7, D=256 with W streamed in 128-wide column slabs.
    B2, S2, D2 = 2, 7, 256
    x4 = jax.random.normal(kx2, (B2, S2, D2), dtype=jnp.float32)
    gamma4 = 1.0 + 0.1 * jax.random.normal(kg2, (D2,), dtype=jnp.float32)
    beta4 = 0.1 * jax.random.normal(kb2, (D2,), dtype=jnp.float32)
    W4 = 0.05 * jax.random.normal(kw2, (D2, D2), dtype=jnp.float32)
    bsub4 = 0.05 * jax.random.normal(kwb2, (D2,), dtype=jnp.float32)
    ref4 = _reference(x4, gamma4, beta4, W4, bsub4)
    out4 = jax.block_until_ready(sublayer_connection_fused_linear(
        x4, gamma4, beta4, W4, bsub4, dropout_p=0.1, training=False, seed=0,
        max_w_cols=128))
    assert jnp.allclose(out4, ref4, atol=5e-2, rtol=1e-2), \
        f"ntiled max err {jnp.max(jnp.abs(out4 - ref4))}"

    print("KERNEL_OK")
</pallas_src>

<mosaic_0001>
module attributes {stable_mosaic.version = 11 : i64} {
  func.func @_fused_kernel_resident(%arg0: i32, %arg1: memref<1xi32, #tpu.memory_space<smem>>, %arg2: memref<32x128xf32, #tpu.memory_space<vmem>>, %arg3: memref<1x128xf32, #tpu.memory_space<vmem>>, %arg4: memref<1x128xf32, #tpu.memory_space<vmem>>, %arg5: memref<128x128xbf16, #tpu.memory_space<vmem>>, %arg6: memref<1x128xf32, #tpu.memory_space<vmem>>, %arg7: memref<32x128xf32, #tpu.memory_space<vmem>>) attributes {dimension_semantics = [#tpu.dimension_semantics<parallel>], iteration_bounds = array<i64: 1>, scalar_prefetch = 1 : i64, scratch_operands = 0 : i64, tpu.core_type = #tpu.core_type<tc>, window_params = [{transform_indices = @transform_0, window_bounds = array<i64: 32, 128>}, {pipeline_mode = #tpu.pipeline_mode<synchronous>, transform_indices = @transform_1, window_bounds = array<i64: 1, 128>}, {pipeline_mode = #tpu.pipeline_mode<synchronous>, transform_indices = @transform_2, window_bounds = array<i64: 1, 128>}, {pipeline_mode = #tpu.pipeline_mode<synchronous>, transform_indices = @transform_3, window_bounds = array<i64: 128, 128>}, {pipeline_mode = #tpu.pipeline_mode<synchronous>, transform_indices = @transform_4, window_bounds = array<i64: 1, 128>}, {transform_indices = @transform_5, window_bounds = array<i64: 32, 128>}]} {
    %c0 = arith.constant 0 : index
    %c0_0 = arith.constant 0 : index
    %0 = vector.load %arg2[%c0, %c0_0] : memref<32x128xf32, #tpu.memory_space<vmem>>, vector<32x128xf32>
    %c0_1 = arith.constant 0 : index
    %c0_2 = arith.constant 0 : index
    %1 = vector.load %arg3[%c0_1, %c0_2] : memref<1x128xf32, #tpu.memory_space<vmem>>, vector<1x128xf32>
    %c0_3 = arith.constant 0 : index
    %c0_4 = arith.constant 0 : index
    %2 = vector.load %arg4[%c0_3, %c0_4] : memref<1x128xf32, #tpu.memory_space<vmem>>, vector<1x128xf32>
    %cst = arith.constant dense<0.000000e+00> : vector<32xf32>
    %3 = vector.multi_reduction <add>, %0, %cst [1] : vector<32x128xf32> to vector<32xf32>
    %4 = vector.shape_cast %3 : vector<32xf32> to vector<32x1xf32>
    %cst_5 = arith.constant 1.280000e+02 : f32
    %5 = vector.broadcast %cst_5 : f32 to vector<32x1xf32>
    %6 = arith.divf %4, %5 : vector<32x1xf32>
    %7 = arith.mulf %0, %0 : vector<32x128xf32>
    %cst_6 = arith.constant dense<0.000000e+00> : vector<32xf32>
    %8 = vector.multi_reduction <add>, %7, %cst_6 [1] : vector<32x128xf32> to vector<32xf32>
    %9 = vector.shape_cast %8 : vector<32xf32> to vector<32x1xf32>
    %cst_7 = arith.constant 1.280000e+02 : f32
    %10 = vector.broadcast %cst_7 : f32 to vector<32x1xf32>
    %11 = arith.divf %9, %10 : vector<32x1xf32>
    %12 = arith.mulf %6, %6 : vector<32x1xf32>
    %13 = arith.subf %11, %12 : vector<32x1xf32>
    %cst_8 = arith.constant 0.000000e+00 : f32
    %14 = vector.broadcast %cst_8 : f32 to vector<32x1xf32>
    %15 = arith.maximumf %13, %14 : vector<32x1xf32>
    %16 = vector.broadcast %6 : vector<32x1xf32> to vector<32x128xf32>
    %17 = arith.subf %0, %16 : vector<32x128xf32>
    %cst_9 = arith.constant 9.99999974E-6 : f32
    %18 = vector.broadcast %cst_9 : f32 to vector<32x1xf32>
    %19 = arith.addf %15, %18 : vector<32x1xf32>
    %20 = math.rsqrt %19 : vector<32x1xf32>
    %21 = vector.broadcast %20 : vector<32x1xf32> to vector<32x128xf32>
    %22 = arith.mulf %17, %21 : vector<32x128xf32>
    %23 = vector.broadcast %1 : vector<1x128xf32> to vector<32x128xf32>
    %24 = arith.mulf %22, %23 : vector<32x128xf32>
    %25 = vector.broadcast %2 : vector<1x128xf32> to vector<32x128xf32>
    %26 = arith.addf %24, %25 : vector<32x128xf32>
    %27 = arith.truncf %26 : vector<32x128xf32> to vector<32x128xbf16>
    %c0_10 = arith.constant 0 : index
    %c0_11 = arith.constant 0 : index
    %28 = vector.load %arg5[%c0_10, %c0_11] : memref<128x128xbf16, #tpu.memory_space<vmem>>, vector<128x128xbf16>
    %cst_12 = arith.constant dense<0.000000e+00> : vector<32x128xf32>
    %29 = tpu.matmul %27, %28, %cst_12 {dimension_numbers = #tpu.dot_dimension_numbers<[1], [0], [0], [1], [0, 0, 1, 1], [], []>} : vector<32x128xbf16>, vector<128x128xbf16>, vector<32x128xf32> -> vector<32x128xf32>
    %c0_13 = arith.constant 0 : index
    %c0_14 = arith.constant 0 : index
    %30 = vector.load %arg6[%c0_13, %c0_14] : memref<1x128xf32, #tpu.memory_space<vmem>>, vector<1x128xf32>
    %31 = vector.broadcast %30 : vector<1x128xf32> to vector<32x128xf32>
    %32 = arith.addf %29, %31 : vector<32x128xf32>
    %33 = arith.addf %0, %32 : vector<32x128xf32>
    %c0_15 = arith.constant 0 : index
    %c0_16 = arith.constant 0 : index
    %34 = vector.load %arg7[%c0_15, %c0_16] : memref<32x128xf32, #tpu.memory_space<vmem>>, vector<32x128xf32>
    tpu.vector_store %arg7[%c0_15, %c0_16], %33 {strides = array<i32>} : memref<32x128xf32, #tpu.memory_space<vmem>>, vector<32x128xf32>,
    return
  }
  func.func @transform_0(%arg0: i32, %arg1: memref<1xi32, #tpu.memory_space<smem>>) -> (i32, i32) {
    %c0_i32 = arith.constant 0 : i32
    %c0_i32_0 = arith.constant 0 : i32
    return %arg0, %c0_i32 : i32, i32
  }
  func.func @transform_1(%arg0: i32, %arg1: memref<1xi32, #tpu.memory_space<smem>>) -> (i32, i32) {
    %c0_i32 = arith.constant 0 : i32
    %c0_i32_0 = arith.constant 0 : i32
    %c0_i32_1 = arith.constant 0 : i32
    return %c0_i32, %c0_i32_0 : i32, i32
  }
  func.func @transform_2(%arg0: i32, %arg1: memref<1xi32, #tpu.memory_space<smem>>) -> (i32, i32) {
    %c0_i32 = arith.constant 0 : i32
    %c0_i32_0 = arith.constant 0 : i32
    %c0_i32_1 = arith.constant 0 : i32
    return %c0_i32, %c0_i32_0 : i32, i32
  }
  func.func @transform_3(%arg0: i32, %arg1: memref<1xi32, #tpu.memory_space<smem>>) -> (i32, i32) {
    %c0_i32 = arith.constant 0 : i32
    %c0_i32_0 = arith.constant 0 : i32
    %c0_i32_1 = arith.constant 0 : i32
    return %c0_i32, %c0_i32_0 : i32, i32
  }
  func.func @transform_4(%arg0: i32, %arg1: memref<1xi32, #tpu.memory_space<smem>>) -> (i32, i32) {
    %c0_i32 = arith.constant 0 : i32
    %c0_i32_0 = arith.constant 0 : i32
    %c0_i32_1 = arith.constant 0 : i32
    return %c0_i32, %c0_i32_0 : i32, i32
  }
  func.func @transform_5(%arg0: i32, %arg1: memref<1xi32, #tpu.memory_space<smem>>) -> (i32, i32) {
    %c0_i32 = arith.constant 0 : i32
    %c0_i32_0 = arith.constant 0 : i32
    return %arg0, %c0_i32 : i32, i32
  }
}

</mosaic_0001>

<llo_original>
// kernel: tpu_custom_call.1
$region0: #{tpu_custom_call.1}
  #allocation0 [shape = 'u32[]', space=smem, size = 0x4, offset = 0x4, fixed_abs, tag = 'smem constant byte address 0x4 - core index']
  #allocation1 [shape = 'u32[144,128]{1,0:T(1,128)}', space=vmem, size = 0x12000, scoped, tag = 'internal scratch']
  #allocation2 [shape = 's32[1]{0}', space=sflag, size = 0x4, scoped, tag = 'scoped memory for tpu_custom_call.1']
  #allocation3 [shape = 's32[1]{0:T(128)S(6)}', space=smem, size = 0x200, scoped, tag = 'prefetched SMEM operand 0']
  %s0 = inlined_call_operand.<no memory space> [shape: s32[1], index: 0, kind: input, shape index: {}]
  %s1 = inlined_call_operand.hbm [shape: f32[16,128], index: 1, kind: input, shape index: {}]
  %s2 = inlined_call_operand.vmem [shape: f32[1,128], index: 2, kind: input, shape index: {}]
  %s3 = inlined_call_operand.vmem [shape: f32[1,128], index: 3, kind: input, shape index: {}]
  %s4 = inlined_call_operand.hbm [shape: bf16[128,128], index: 4, kind: input, shape index: {}]
  %s5 = inlined_call_operand.vmem [shape: f32[1,128], index: 5, kind: input, shape index: {}]
  %s6 = inlined_call_operand.hbm [shape: f32[16,128], index: 6, kind: output, shape index: {}]
  %s7 = sld [smem:[#allocation0]]
  $region38: #{tpu_custom_call.1} parent=0
    _
  %s9 = ssub.s32 1, %s7
  %s10 = scalar_select 0, %s9, %s7
  %11 = sst [smem:[#allocation3]] %s0
  $region1: #{tpu_custom_call.1} parent=0
    #allocation4 [shape = 'u8[16384]{0}', space=vmem, size = 0x4000, scoped, tag = 'input window, operand 1, single buffered']
    #allocation5 [shape = 's32[1]{0}', space=sflag, size = 0x4, scoped, tag = 'scoped memory for tpu_custom_call.1']
    #allocation6 [shape = 's32[1]{0}', space=sflag, size = 0x4, scoped, tag = 'scoped memory for tpu_custom_call.1']
    #allocation7 [shape = 'u8[32768]{0}', space=vmem, size = 0x8000, scoped, tag = 'input window, operand 4, single buffered']
    #allocation8 [shape = 's32[1]{0}', space=sflag, size = 0x4, scoped, tag = 'scoped memory for tpu_custom_call.1']
    #allocation9 [shape = 'u8[16384]{0}', space=vmem, size = 0x4000, scoped, tag = 'output window, operand 0, single buffered']
    %12 = vsyncpa [#allocation5], 0
    %13 = vsyncpa [#allocation8], 0
    %14 = vsyncpa [#allocation6], 0
    // Predicated region
    $region2: #{tpu_custom_call.1} parent=1 // pred_check
      _
    $region3: #{tpu_custom_call.1} parent=1 // pred_check_branch
      %16 = sbr.rel (0) target = $region5
    $region4: #{tpu_custom_call.1} parent=1 // pred_region
      %s18 = ssub.s32 512, 256
      %19 = vsyncadd [#allocation5], %s18
      %s20 = sshll.u32 [#allocation4], 4
      %s21 = int_to_ptr.vmem [resolvable:$true] %s20
      %26 = dma.hbm_to_vmem [thread:$0]  %s1, 256, %s21, [#allocation5], 128, 128, 8
    $region5: #{tpu_custom_call.1} parent=1 // pred_fallthru
      _
    // Predicated region
    $region6: #{tpu_custom_call.1} parent=1 // pred_check
      _
    $region7: #{tpu_custom_call.1} parent=1 // pred_check_branch
      %28 = sbr.rel (0) target = $region9
    $region8: #{tpu_custom_call.1} parent=1 // pred_region
      _
    $region9: #{tpu_custom_call.1} parent=1 // pred_fallthru
      _
    // Predicated region
    $region10: #{tpu_custom_call.1} parent=1 // pred_check
      _
    $region11: #{tpu_custom_call.1} parent=1 // pred_check_branch
      %30 = sbr.rel (0) target = $region13
    $region12: #{tpu_custom_call.1} parent=1 // pred_region
      _
    $region13: #{tpu_custom_call.1} parent=1 // pred_fallthru
      _
    // Predicated region
    $region14: #{tpu_custom_call.1} parent=1 // pred_check
      _
    $region15: #{tpu_custom_call.1} parent=1 // pred_check_branch
      %32 = sbr.rel (0) target = $region17
    $region16: #{tpu_custom_call.1} parent=1 // pred_region
      %s34 = ssub.s32 1024, 1024
      %35 = vsyncadd [#allocation8], %s34
      %s36 = sshll.u32 [#allocation7], 4
      %s37 = int_to_ptr.vmem [resolvable:$true] %s36
      %42 = dma.hbm_to_vmem [thread:$0]  %s4, 1024, %s37, [#allocation8], 64, 64, 4
    $region17: #{tpu_custom_call.1} parent=1 // pred_fallthru
      _
    // Predicated region
    $region18: #{tpu_custom_call.1} parent=1 // pred_check
      _
    $region19: #{tpu_custom_call.1} parent=1 // pred_check_branch
      %44 = sbr.rel (0) target = $region21
    $region20: #{tpu_custom_call.1} parent=1 // pred_region
      _
    $region21: #{tpu_custom_call.1} parent=1 // pred_fallthru
      _
    // Predicated region
    $region22: #{tpu_custom_call.1} parent=1 // pred_check
      _
    $region23: #{tpu_custom_call.1} parent=1 // pred_check_branch
      %46 = sbr.rel (0) target = $region25
    $region24: #{tpu_custom_call.1} parent=1 // pred_region
      %47 = dma.done [#allocation5], 512
    $region25: #{tpu_custom_call.1} parent=1 // pred_fallthru
      _
    // Predicated region
    $region26: #{tpu_custom_call.1} parent=1 // pred_check
      _
    $region27: #{tpu_custom_call.1} parent=1 // pred_check_branch
      %49 = sbr.rel (0) target = $region29
    $region28: #{tpu_custom_call.1} parent=1 // pred_region
      %50 = dma.done [#allocation8], 1024
    $region29: #{tpu_custom_call.1} parent=1 // pred_fallthru
      _
    %v52 = vld [vmem:[#allocation4] sm:$0xff]
    %v53 = vld [vmem:[#allocation4 + $0x8] sm:$0xff]
    %v54 = vld [vmem:[#allocation4 + $0x10] sm:$0xff]
    %v55 = vld [vmem:[#allocation4 + $0x18] sm:$0xff]
    %v56 = vld [vmem:[%s2] sm:$0x1]
    %v57 = vld [vmem:[%s3] sm:$0x1]
    %58 = vadd.xlane.f32.xlu0 %v52
    %v59 = vpop.xlane.xlu0 %58
    %60 = vadd.xlane.f32.xlu0 %v53
    %v61 = vpop.xlane.xlu0 %60
    %62 = vadd.xlane.f32.xlu0 %v54
    %v63 = vpop.xlane.xlu0 %62
    %64 = vadd.xlane.f32.xlu0 %v55
    %v65 = vpop.xlane.xlu0 %64
    %v66 = vrcp.pop 128.0
    %v67 = vmul.f32 %v59, %v66
    %v68 = vmul.f32 %v61, %v66
    %v69 = vmul.f32 %v63, %v66
    %v70 = vmul.f32 %v65, %v66
    %v71 = vmul.f32 %v52, %v52
    %v72 = vmul.f32 %v53, %v53
    %v73 = vmul.f32 %v54, %v54
    %v74 = vmul.f32 %v55, %v55
    %75 = vadd.xlane.f32.xlu0 %v71
    %v76 = vpop.xlane.xlu0 %75
    %77 = vadd.xlane.f32.xlu0 %v72
    %v78 = vpop.xlane.xlu0 %77
    %79 = vadd.xlane.f32.xlu0 %v73
    %v80 = vpop.xlane.xlu0 %79
    %81 = vadd.xlane.f32.xlu0 %v74
    %v82 = vpop.xlane.xlu0 %81
    %v83 = vmul.f32 %v76, %v66
    %v84 = vmul.f32 %v78, %v66
    %v85 = vmul.f32 %v80, %v66
    %v86 = vmul.f32 %v82, %v66
    %v87 = vmul.f32 %v67, %v67
    %v88 = vmul.f32 %v68, %v68
    %v89 = vmul.f32 %v69, %v69
    %v90 = vmul.f32 %v70, %v70
    %v91 = vsub.f32 %v83, %v87
    %v92 = vsub.f32 %v84, %v88
    %v93 = vsub.f32 %v85, %v89
    %v94 = vsub.f32 %v86, %v90
    %v95 = vmax.f32 %v91, 0.0
    %v96 = vmax.f32 %v92, 0.0
    %v97 = vmax.f32 %v93, 0.0
    %v98 = vmax.f32 %v94, 0.0
    %v99 = vsub.f32 %v52, %v67
    %v100 = vsub.f32 %v53, %v68
    %v101 = vsub.f32 %v54, %v69
    %v102 = vsub.f32 %v55, %v70
    %v103 = vadd.f32 %v95, 1e-05
    %v104 = vadd.f32 %v96, 1e-05
    %v105 = vadd.f32 %v97, 1e-05
    %v106 = vadd.f32 %v98, 1e-05
    %v107 = vrsqrt.pop %v103
    %v108 = vrsqrt.pop %v104
    %v109 = vrsqrt.pop %v105
    %v110 = vrsqrt.pop %v106
    %v111 = vmul.f32 %v99, %v107
    %v112 = vmul.f32 %v100, %v108
    %v113 = vmul.f32 %v101, %v109
    %v114 = vmul.f32 %v102, %v110
    %v116 = vlaneseq
    %v117 = vshrl.u32 %v116, 7
    %v118 = vsub.s32 0, %v117
    %v119 = vrot.slane %v56, %v118
    %v121 = vmul.f32 %v111, %v119
    %v122 = vmul.f32 %v112, %v119
    %v123 = vmul.f32 %v113, %v119
    %v124 = vmul.f32 %v114, %v119
    %v126 = vlaneseq
    %v127 = vshrl.u32 %v126, 7
    %v128 = vsub.s32 0, %v127
    %v129 = vrot.slane %v57, %v128
    %v131 = vadd.f32 %v121, %v129
    %v132 = vadd.f32 %v122, %v129
    %v133 = vadd.f32 %v123, %v129
    %v134 = vadd.f32 %v124, %v129
    %v135 = vpack.c.bf16 %v132, %v131
    %v136 = vpack.c.bf16 %v134, %v133
    %v137 = vld [vmem:[#allocation7] sm:$0xf]
    %v138 = vld [vmem:[#allocation7 + $0x4] sm:$0xf]
    %v139 = vld [vmem:[#allocation7 + $0x8] sm:$0xf]
    %v140 = vld [vmem:[#allocation7 + $0xc] sm:$0xf]
    %v141 = vld [vmem:[#allocation7 + $0x10] sm:$0xf]
    %v142 = vld [vmem:[#allocation7 + $0x14] sm:$0xf]
    %v143 = vld [vmem:[#allocation7 + $0x18] sm:$0xf]
    %v144 = vld [vmem:[#allocation7 + $0x1c] sm:$0xf]
    %v145 = vld [vmem:[#allocation7 + $0x20] sm:$0xf]
    %v146 = vld [vmem:[#allocation7 + $0x24] sm:$0xf]
    %v147 = vld [vmem:[#allocation7 + $0x28] sm:$0xf]
    %v148 = vld [vmem:[#allocation7 + $0x2c] sm:$0xf]
    %v149 = vld [vmem:[#allocation7 + $0x30] sm:$0xf]
    %v150 = vld [vmem:[#allocation7 + $0x34] sm:$0xf]
    %v151 = vld [vmem:[#allocation7 + $0x38] sm:$0xf]
    %v152 = vld [vmem:[#allocation7 + $0x3c] sm:$0xf]
    %v153 = vld [vmem:[%s5] sm:$0x1]
    %v155 = vlaneseq
    %v156 = vshrl.u32 %v155, 7
    %v157 = vsub.s32 0, %v156
    %v158 = vrot.slane %v153, %v157
    %v176 = vunpack.c.l.b16 %v137
    %v177 = vunpack.c.l.b16 %v138
    %v178 = vunpack.c.l.b16 %v139
    %v179 = vunpack.c.l.b16 %v140
    %v180 = vunpack.c.l.b16 %v141
    %v181 = vunpack.c.l.b16 %v142
    %v182 = vunpack.c.l.b16 %v143
    %v183 = vunpack.c.l.b16 %v144
    %v184 = vunpack.c.l.b16 %v145
    %v185 = vunpack.c.l.b16 %v146
    %v186 = vunpack.c.l.b16 %v147
    %v187 = vunpack.c.l.b16 %v148
    %v188 = vunpack.c.l.b16 %v149
    %v189 = vunpack.c.l.b16 %v150
    %v190 = vunpack.c.l.b16 %v151
    %v191 = vunpack.c.l.b16 %v152
    %v192 = vpack.c.b16 %v177, %v176
    %v193 = vpack.c.b16 %v179, %v178
    %v194 = vpack.c.b16 %v181, %v180
    %v195 = vpack.c.b16 %v183, %v182
    %v196 = vpack.c.b16 %v185, %v184
    %v197 = vpack.c.b16 %v187, %v186
    %v198 = vpack.c.b16 %v189, %v188
    %v199 = vpack.c.b16 %v191, %v190
    %208 = vmatprep.subr.bf16.mxu0 0
    %209 = vmatpush1.bf16.msra.mxu0 %v192
    %210 = vmatprep.subr.bf16.mxu0 0
    %211 = vmatpush1.bf16.msra.mxu0 %v193
    %212 = vmatprep.subr.bf16.mxu0 0
    %213 = vmatpush1.bf16.msra.mxu0 %v194
    %214 = vmatprep.subr.bf16.mxu0 0
    %215 = vmatpush1.bf16.msra.mxu0 %v195
    %216 = vmatprep.subr.bf16.mxu0 0
    %217 = vmatpush1.bf16.msra.mxu0 %v196
    %218 = vmatprep.subr.bf16.mxu0 0
    %219 = vmatpush1.bf16.msra.mxu0 %v197
    %220 = vmatprep.subr.bf16.mxu0 0
    %221 = vmatpush1.bf16.msra.mxu0 %v198
    %222 = vmatprep.subr.bf16.mxu0 0
    %223 = vmatpush1.bf16.msra.mxu0 %v199
    %224 = vmatprep.subr.bf16.mxu0 0
    %225 = vmatpush1.bf16.msra.mxu0 0
    %226 = vmatprep.subr.bf16.mxu0 0
    %227 = vmatpush1.bf16.msra.mxu0 0
    %228 = vmatprep.subr.bf16.mxu0 0
    %229 = vmatpush1.bf16.msra.mxu0 0
    %230 = vmatprep.subr.bf16.mxu0 0
    %231 = vmatpush1.bf16.msra.mxu0 0
    %232 = vmatprep.subr.bf16.mxu0 0
    %233 = vmatpush1.bf16.msra.mxu0 0
    %234 = vmatprep.subr.bf16.mxu0 0
    %235 = vmatpush1.bf16.msra.mxu0 0
    %236 = vmatprep.subr.bf16.mxu0 0
    %237 = vmatpush1.bf16.msra.mxu0 0
    %238 = vmatprep.subr.bf16.mxu0 0
    %239 = vmatpush1.bf16.msra.mxu0 0
    %240 = vmatprep.mubr.bf16.mxu0 0
    %241 = vmatmul.mubr.bf16.gmra.mrb[0].mxu0 %v135
    %v242 = vpop.f32.mrb[0].mxu0
    %v243 = vadd.f32 %v158, %v242
    %v244 = vpop.f32.mrb[0].mxu0
    %v245 = vpop.f32.mrb[0].mxu0
    %v246 = vadd.f32 %v158, %v245
    %v247 = vpop.f32.mrb[0].mxu0
    %248 = vmatprep.mubr.bf16.mxu0 0
    %249 = vmatmul.mubr.bf16.gmra.mrb[0].mxu0 %v136
    %v250 = vpop.f32.mrb[0].mxu0
    %v251 = vadd.f32 %v158, %v250
    %v252 = vpop.f32.mrb[0].mxu0
    %v253 = vpop.f32.mrb[0].mxu0
    %v254 = vadd.f32 %v158, %v253
    %v255 = vpop.f32.mrb[0].mxu0
    %256 = vdwg.mxu0
    %v257 = vadd.f32 %v52, %v243
    %v258 = vadd.f32 %v53, %v246
    %v259 = vadd.f32 %v54, %v251
    %v260 = vadd.f32 %v55, %v254
    %261 = vst [vmem:[#allocation9] sm:$0xff] %v257
    %262 = vst [vmem:[#allocation9 + $0x8] sm:$0xff] %v258
    %263 = vst [vmem:[#allocation9 + $0x10] sm:$0xff] %v259
    %264 = vst [vmem:[#allocation9 + $0x18] sm:$0xff] %v260
    // Predicated region
    $region30: #{tpu_custom_call.1} parent=1 // pred_check
      _
    $region31: #{tpu_custom_call.1} parent=1 // pred_check_branch
      %266 = sbr.rel (0) target = $region33
    $region32: #{tpu_custom_call.1} parent=1 // pred_region
      %s268 = ssub.s32 512, 256
      %269 = vsyncadd [#allocation6], %s268
      %s270 = sshll.u32 [#allocation9], 4
      %s271 = int_to_ptr.vmem [resolvable:$true] %s270
      %276 = dma.vmem_to_hbm [thread:$0]  %s271, 256, %s6, [#allocation6], 128, 128, 8
    $region33: #{tpu_custom_call.1} parent=1 // pred_fallthru
      _
    // Predicated region
    $region34: #{tpu_custom_call.1} parent=1 // pred_check
      _
    $region35: #{tpu_custom_call.1} parent=1 // pred_check_branch
      %278 = sbr.rel (0) target = $region37
    $region36: #{tpu_custom_call.1} parent=1 // pred_region
      %279 = dma.done [#allocation6], 512
    $region37: #{tpu_custom_call.1} parent=1 // pred_fallthru
      _
    %280 = vsyncpa [#allocation5], 1
    %281 = vsyncpa [#allocation8], 1
    %282 = vsyncpa [#allocation6], 1

</llo_original>
